<compile_context>
chip_gen: v7x
topology: tpu7x:2x2x1
jax: 0.10.0
libtpu: 0.0.40
codegen_flags: <defaults>
</compile_context>

<pallas_src>
import math

import jax
import jax.numpy as jnp
from jax.experimental import pallas as pl
from jax.experimental.pallas import tpu as pltpu


def _make_kernel(K, C, Cout, L, n_slabs, conv_first):
    """One grid step: the (Cout, t_blk*Vp) output tile, computed slab-by-slab."""

    def kernel(x_ref, w_ref, a_ref, bt_ref, o_ref):
        cd = x_ref.dtype
        bias_slab = bt_ref[...]                          # (Cout, L) f32, hoisted bias
        for s in range(n_slabs):                         # static unroll (<= 8 slabs)
            lo = s * L
            xs = x_ref[0, :, lo:lo + L]                  # (C, L) lane-aligned load
            acc = bias_slab                              # (Cout, L) f32
            for k in range(K):                           # static unroll (K is tiny)
                if conv_first:
                    # (Cout, C) @ (C, L), then a full-depth block-diag A stage.
                    y = jnp.dot(w_ref[k], xs,
                                preferred_element_type=jnp.float32).astype(cd)
                    acc = acc + jnp.dot(y, a_ref[k],
                                        preferred_element_type=jnp.float32)
                else:
                    # Cheaper when Cout > C: contract the vertex dim first.
                    z = jnp.dot(xs, a_ref[k],
                                preferred_element_type=jnp.float32).astype(cd)
                    acc = acc + jnp.dot(w_ref[k], z,
                                        preferred_element_type=jnp.float32)
            o_ref[0, :, lo:lo + L] = acc.astype(o_ref.dtype)   # unmasked 128-lane store

    return kernel


def _vmem_capacity_bytes():
    """Best-effort VMEM capacity query; conservative fallback (v7x per-core)."""
    try:
        info = pltpu.get_tpu_info()
        cap = getattr(info, "vmem_capacity_bytes", None)
        if cap:
            return int(cap)
    except Exception:
        pass
    return 64 << 20


def _pad_vertex_dim(V):
    """Smallest Vp >= V with Vp | 128 or 128 | Vp, so t_blk*Vp hits 128-lane tiles."""
    if V <= 128:
        for d in (1, 2, 4, 8, 16, 32, 64, 128):
            if d >= V:
                return d
    return ((V + 127) // 128) * 128


def _choose_tiles(T, Vp, L, C, Cout, K, cd_size, out_size, N,
                  budget_bytes, max_slabs=8):
    """Pick t_blk from a per-step VMEM model. Returns (t_blk, Tp, step_bytes)."""
    t_min = L // Vp                              # smallest t granule = one L-lane slab
    t_cap = -(-T // t_min) * t_min               # T rounded up to the granule
    t_cap = min(t_cap, max_slabs * t_min)        # bound unroll size / tile size

    def step_bytes(t_blk):
        tv = t_blk * Vp
        x_tile = C * tv * cd_size
        o_tile = Cout * tv * out_size
        resident = (K * Cout * C * cd_size       # weights
                    + K * L * L * cd_size        # block-diag adjacency
                    + Cout * L * 4)              # hoisted bias slab (f32)
        interm = Cout * L * 4 + max(C, Cout) * L * cd_size   # acc + y/z
        # x/out double-buffered by the pipeline; residents double-buffered too
        # (default buffering — Buffered(1) intentionally not used).
        return 2 * x_tile + 2 * o_tile + 2 * resident + interm

    best = t_min
    t = t_min
    while t <= t_cap:
        if step_bytes(t) <= budget_bytes:
            best = t
        t += t_min

    # Megacore balance: when N == 1, prefer >= 2 grid steps so both cores work.
    if N == 1 and -(-T // best) < 2 and best > t_min:
        best = max(t_min, (best // 2 // t_min) * t_min)

    Tp = -(-T // best) * best
    return best, Tp, step_bytes(best)


def graph_conv(x, weight, bias, A, compute_dtype=None):
    """x: (N, C, T, V); weight: (K, Cout, C); bias: (K, Cout); A: (K, V, V).
    Returns (N, Cout, T, V), matching the PyTorch GraphConv forward.
    compute_dtype: optional MXU input dtype (e.g. jnp.bfloat16); accumulation is
    always f32 (note: bf16 adds one inter-stage rounding of y / z)."""
    N, C, T, V = x.shape
    K, Cout, _ = weight.shape

    out_dtype = x.dtype
    cd = x.dtype if compute_dtype is None else compute_dtype
    cd_size = jnp.dtype(cd).itemsize
    out_size = jnp.dtype(out_dtype).itemsize

    # ---- lane geometry -----------------------------------------------------
    Vp = _pad_vertex_dim(V)                            # e.g. 25 -> 32, 16 -> 16
    L = (Vp * 128) // math.gcd(Vp, 128)                # lcm(Vp, 128): slab width
    conv_first = Cout <= C                             # cheaper association

    cap = _vmem_capacity_bytes()
    budget = max(12 << 20, min(32 << 20, cap // 4))
    t_blk, Tp, step_need = _choose_tiles(T, Vp, L, C, Cout, K,
                                         cd_size, out_size, N, budget)
    tv = t_blk * Vp
    n_slabs = tv // L

    # ---- one-time wrapper-side prep -----------------------------------------
    # Zero-pad V -> Vp and T -> Tp; padded lanes/time contribute nothing and are
    # sliced off at the end.
    if Vp != V or Tp != T:
        x = jnp.pad(x, ((0, 0), (0, 0), (0, Tp - T), (0, Vp - V)))
    x2 = x.reshape(N, C, Tp * Vp).astype(cd)           # native order, lane-dense

    A_pad = jnp.zeros((K, Vp, Vp), dtype=jnp.float32).at[:, :V, :V].set(
        A.astype(jnp.float32))
    # Block-diagonal adjacency: A_bd[k] = I_{L//Vp} (x) A_k   -> (K, L, L)
    m = L // Vp
    A_bd = jnp.einsum('ij,kvw->kivjw', jnp.eye(m, dtype=jnp.float32),
                      A_pad).reshape(K, L, L).astype(cd)

    w_arr = weight.astype(cd)                          # (K, Cout, C), per-k in-kernel

    # Bias hoist through A: sum_k b_k[c] * (sum_v A_k[v, w]), tiled to one L-slab.
    bias_cw = jnp.einsum('kc,kw->cw', bias.astype(jnp.float32),
                         A_pad.sum(axis=1))            # (Cout, Vp)
    bt = jnp.tile(bias_cw, (1, m))                     # (Cout, L) f32

    kernel = _make_kernel(K, C, Cout, L, n_slabs, conv_first)

    lanes_total = N * Tp * Vp
    flops = (2 * K * Cout * C * lanes_total            # conv stage
             + 2 * K * min(C, Cout) * L * lanes_total)  # block-diag A stage
    bytes_accessed = int(C * lanes_total * cd_size
                         + Cout * lanes_total * out_size
                         + w_arr.size * cd_size + A_bd.size * cd_size + bt.size * 4)
    vmem_limit = int(min(max(2 * step_need, 32 << 20), 64 << 20))

    out3 = pl.pallas_call(
        kernel,
        out_shape=jax.ShapeDtypeStruct((N, Cout, Tp * Vp), out_dtype),
        grid_spec=pltpu.PrefetchScalarGridSpec(
            num_scalar_prefetch=0,
            grid=(N, Tp // t_blk),
            in_specs=[
                pl.BlockSpec((1, C, tv), lambda n, tb: (n, 0, tb)),     # x tile
                pl.BlockSpec((K, Cout, C), lambda n, tb: (0, 0, 0)),    # weights (resident)
                pl.BlockSpec((K, L, L), lambda n, tb: (0, 0, 0)),       # block-diag A (resident)
                pl.BlockSpec((Cout, L), lambda n, tb: (0, 0)),          # bias slab (resident)
            ],
            out_specs=pl.BlockSpec((1, Cout, tv), lambda n, tb: (n, 0, tb)),
        ),
        compiler_params=pltpu.CompilerParams(
            dimension_semantics=("parallel", "parallel"),
            vmem_limit_bytes=vmem_limit,
        ),
        cost_estimate=pl.CostEstimate(
            flops=flops, transcendentals=0, bytes_accessed=bytes_accessed),
    )(x2, w_arr, A_bd, bt)

    out = out3.reshape(N, Cout, Tp, Vp)
    if Vp != V or Tp != T:
        out = out[:, :, :T, :V]
    return out


def graph_conv_ref(x, weight, bias, A):
    """Pure-JAX reference mirroring the PyTorch forward."""
    N, C, T, V = x.shape
    K, Cout, _ = weight.shape
    w2 = weight.reshape(K * Cout, C)
    y = jnp.einsum('oc,nctv->notv', w2, x) + bias.reshape(1, K * Cout, 1, 1)
    y = y.reshape(N, K, Cout, T, V)
    return jnp.einsum('nkctv,kvw->nctw', y, A)


def _run_case(key, N, C, T, V, K, Cout):
    kx, kw, kb, ka = jax.random.split(key, 4)
    x = jax.random.normal(kx, (N, C, T, V), dtype=jnp.float32)
    bound = 1.0 / (C ** 0.5)
    weight = jax.random.uniform(kw, (K, Cout, C), minval=-bound, maxval=bound,
                                dtype=jnp.float32)
    bias = jax.random.uniform(kb, (K, Cout), minval=-bound, maxval=bound,
                              dtype=jnp.float32)
    A = jax.random.normal(ka, (K, V, V), dtype=jnp.float32)

    out = jax.block_until_ready(graph_conv(x, weight, bias, A))
    ref = jax.block_until_ready(graph_conv_ref(x, weight, bias, A))
    assert out.shape == (N, Cout, T, V), out.shape
    err = jnp.max(jnp.abs(out - ref))
    assert jnp.allclose(out, ref, atol=1e-4, rtol=1e-4), f"max err {err}"


if __name__ == "__main__":
    key = jax.random.PRNGKey(0)
    k1, k2, k3 = jax.random.split(key, 3)
    # Expanding layer (Cout > C): A-then-W path, single slab.
    _run_case(k1, N=2, C=4, T=8, V=16, K=3, Cout=8)
    # Contracting layer (Cout <= C): conv-first path, multi-slab tile (tv=512).
    _run_case(k2, N=2, C=8, T=32, V=16, K=3, Cout=4)
    # Skeleton-like V=25 (pads to 32), odd T, N=1 (exercises T/V padding + grid balance).
    _run_case(k3, N=1, C=3, T=6, V=25, K=2, Cout=5)
    print("KERNEL_OK")
</pallas_src>

<mosaic_0001>
module attributes {stable_mosaic.version = 11 : i64} {
  func.func @kernel(%arg0: i32, %arg1: i32, %arg2: memref<1x4x128xf32, #tpu.memory_space<vmem>>, %arg3: memref<3x8x4xf32, #tpu.memory_space<vmem>>, %arg4: memref<3x128x128xf32, #tpu.memory_space<vmem>>, %arg5: memref<8x128xf32, #tpu.memory_space<vmem>>, %arg6: memref<1x8x128xf32, #tpu.memory_space<vmem>>) attributes {dimension_semantics = [#tpu.dimension_semantics<parallel>, #tpu.dimension_semantics<parallel>], iteration_bounds = array<i64: 2, 1>, scalar_prefetch = 0 : i64, scratch_operands = 0 : i64, tpu.core_type = #tpu.core_type<tc>, window_params = [{transform_indices = @transform_0, window_bounds = array<i64: 1, 4, 128>}, {pipeline_mode = #tpu.pipeline_mode<synchronous>, transform_indices = @transform_1, window_bounds = array<i64: 3, 8, 4>}, {pipeline_mode = #tpu.pipeline_mode<synchronous>, transform_indices = @transform_2, window_bounds = array<i64: 3, 128, 128>}, {pipeline_mode = #tpu.pipeline_mode<synchronous>, transform_indices = @transform_3, window_bounds = array<i64: 8, 128>}, {transform_indices = @transform_4, window_bounds = array<i64: 1, 8, 128>}]} {
    %c0 = arith.constant 0 : index
    %c0_0 = arith.constant 0 : index
    %0 = vector.load %arg5[%c0, %c0_0] : memref<8x128xf32, #tpu.memory_space<vmem>>, vector<8x128xf32>
    %c0_1 = arith.constant 0 : index
    %c0_2 = arith.constant 0 : index
    %c0_3 = arith.constant 0 : index
    %1 = vector.load %arg2[%c0_1, %c0_2, %c0_3] : memref<1x4x128xf32, #tpu.memory_space<vmem>>, vector<1x4x128xf32>
    %2 = vector.shape_cast %1 : vector<1x4x128xf32> to vector<4x128xf32>
    %c0_4 = arith.constant 0 : index
    %c0_5 = arith.constant 0 : index
    %c0_6 = arith.constant 0 : index
    %3 = vector.load %arg4[%c0_4, %c0_5, %c0_6] : memref<3x128x128xf32, #tpu.memory_space<vmem>>, vector<1x128x128xf32>
    %4 = vector.shape_cast %3 : vector<1x128x128xf32> to vector<128x128xf32>
    %cst = arith.constant dense<0.000000e+00> : vector<4x128xf32>
    %5 = tpu.matmul %2, %4, %cst {dimension_numbers = #tpu.dot_dimension_numbers<[1], [0], [0], [1], [0, 0, 1, 1], [], []>} : vector<4x128xf32>, vector<128x128xf32>, vector<4x128xf32> -> vector<4x128xf32>
    %c0_7 = arith.constant 0 : index
    %c0_8 = arith.constant 0 : index
    %c0_9 = arith.constant 0 : index
    %6 = vector.load %arg3[%c0_7, %c0_8, %c0_9] : memref<3x8x4xf32, #tpu.memory_space<vmem>>, vector<1x8x4xf32>
    %7 = vector.shape_cast %6 : vector<1x8x4xf32> to vector<8x4xf32>
    %cst_10 = arith.constant dense<0.000000e+00> : vector<8x128xf32>
    %8 = tpu.matmul %7, %5, %cst_10 {dimension_numbers = #tpu.dot_dimension_numbers<[1], [0], [0], [1], [0, 0, 1, 1], [], []>} : vector<8x4xf32>, vector<4x128xf32>, vector<8x128xf32> -> vector<8x128xf32>
    %9 = arith.addf %0, %8 : vector<8x128xf32>
    %c1 = arith.constant 1 : index
    %c0_11 = arith.constant 0 : index
    %c0_12 = arith.constant 0 : index
    %10 = vector.load %arg4[%c1, %c0_11, %c0_12] : memref<3x128x128xf32, #tpu.memory_space<vmem>>, vector<1x128x128xf32>
    %11 = vector.shape_cast %10 : vector<1x128x128xf32> to vector<128x128xf32>
    %cst_13 = arith.constant dense<0.000000e+00> : vector<4x128xf32>
    %12 = tpu.matmul %2, %11, %cst_13 {dimension_numbers = #tpu.dot_dimension_numbers<[1], [0], [0], [1], [0, 0, 1, 1], [], []>} : vector<4x128xf32>, vector<128x128xf32>, vector<4x128xf32> -> vector<4x128xf32>
    %c1_14 = arith.constant 1 : index
    %c0_15 = arith.constant 0 : index
    %c0_16 = arith.constant 0 : index
    %13 = vector.load %arg3[%c1_14, %c0_15, %c0_16] : memref<3x8x4xf32, #tpu.memory_space<vmem>>, vector<1x8x4xf32>
    %14 = vector.shape_cast %13 : vector<1x8x4xf32> to vector<8x4xf32>
    %cst_17 = arith.constant dense<0.000000e+00> : vector<8x128xf32>
    %15 = tpu.matmul %14, %12, %cst_17 {dimension_numbers = #tpu.dot_dimension_numbers<[1], [0], [0], [1], [0, 0, 1, 1], [], []>} : vector<8x4xf32>, vector<4x128xf32>, vector<8x128xf32> -> vector<8x128xf32>
    %16 = arith.addf %9, %15 : vector<8x128xf32>
    %c2 = arith.constant 2 : index
    %c0_18 = arith.constant 0 : index
    %c0_19 = arith.constant 0 : index
    %17 = vector.load %arg4[%c2, %c0_18, %c0_19] : memref<3x128x128xf32, #tpu.memory_space<vmem>>, vector<1x128x128xf32>
    %18 = vector.shape_cast %17 : vector<1x128x128xf32> to vector<128x128xf32>
    %cst_20 = arith.constant dense<0.000000e+00> : vector<4x128xf32>
    %19 = tpu.matmul %2, %18, %cst_20 {dimension_numbers = #tpu.dot_dimension_numbers<[1], [0], [0], [1], [0, 0, 1, 1], [], []>} : vector<4x128xf32>, vector<128x128xf32>, vector<4x128xf32> -> vector<4x128xf32>
    %c2_21 = arith.constant 2 : index
    %c0_22 = arith.constant 0 : index
    %c0_23 = arith.constant 0 : index
    %20 = vector.load %arg3[%c2_21, %c0_22, %c0_23] : memref<3x8x4xf32, #tpu.memory_space<vmem>>, vector<1x8x4xf32>
    %21 = vector.shape_cast %20 : vector<1x8x4xf32> to vector<8x4xf32>
    %cst_24 = arith.constant dense<0.000000e+00> : vector<8x128xf32>
    %22 = tpu.matmul %21, %19, %cst_24 {dimension_numbers = #tpu.dot_dimension_numbers<[1], [0], [0], [1], [0, 0, 1, 1], [], []>} : vector<8x4xf32>, vector<4x128xf32>, vector<8x128xf32> -> vector<8x128xf32>
    %23 = arith.addf %16, %22 : vector<8x128xf32>
    %c0_25 = arith.constant 0 : index
    %c0_26 = arith.constant 0 : index
    %c0_27 = arith.constant 0 : index
    %24 = vector.load %arg6[%c0_25, %c0_26, %c0_27] : memref<1x8x128xf32, #tpu.memory_space<vmem>>, vector<1x8x128xf32>
    %25 = vector.shape_cast %24 : vector<1x8x128xf32> to vector<8x128xf32>
    %26 = vector.shape_cast %23 : vector<8x128xf32> to vector<1x8x128xf32>
    tpu.vector_store %arg6[%c0_25, %c0_26, %c0_27], %26 {strides = array<i32>} : memref<1x8x128xf32, #tpu.memory_space<vmem>>, vector<1x8x128xf32>,
    return
  }
  func.func @transform_0(%arg0: i32, %arg1: i32) -> (i32, i32, i32) {
    %c0_i32 = arith.constant 0 : i32
    %c0_i32_0 = arith.constant 0 : i32
    return %arg0, %c0_i32, %arg1 : i32, i32, i32
  }
  func.func @transform_1(%arg0: i32, %arg1: i32) -> (i32, i32, i32) {
    %c0_i32 = arith.constant 0 : i32
    %c0_i32_0 = arith.constant 0 : i32
    %c0_i32_1 = arith.constant 0 : i32
    %c0_i32_2 = arith.constant 0 : i32
    return %c0_i32, %c0_i32_0, %c0_i32_1 : i32, i32, i32
  }
  func.func @transform_2(%arg0: i32, %arg1: i32) -> (i32, i32, i32) {
    %c0_i32 = arith.constant 0 : i32
    %c0_i32_0 = arith.constant 0 : i32
    %c0_i32_1 = arith.constant 0 : i32
    %c0_i32_2 = arith.constant 0 : i32
    return %c0_i32, %c0_i32_0, %c0_i32_1 : i32, i32, i32
  }
  func.func @transform_3(%arg0: i32, %arg1: i32) -> (i32, i32) {
    %c0_i32 = arith.constant 0 : i32
    %c0_i32_0 = arith.constant 0 : i32
    %c0_i32_1 = arith.constant 0 : i32
    return %c0_i32, %c0_i32_0 : i32, i32
  }
  func.func @transform_4(%arg0: i32, %arg1: i32) -> (i32, i32, i32) {
    %c0_i32 = arith.constant 0 : i32
    %c0_i32_0 = arith.constant 0 : i32
    return %arg0, %c0_i32, %arg1 : i32, i32, i32
  }
}

</mosaic_0001>

<llo_original>
// kernel: tpu_custom_call.1
$region0: #{tpu_custom_call.1}
  #allocation0 [shape = 'u32[]', space=smem, size = 0x4, offset = 0x4, fixed_abs, tag = 'smem constant byte address 0x4 - core index']
  #allocation1 [shape = 'u32[144,128]{1,0:T(1,128)}', space=vmem, size = 0x12000, scoped, tag = 'internal scratch']
  %s0 = inlined_call_operand.vmem [shape: f32[2,4,128], index: 0, kind: input, shape index: {}]
  %s1 = inlined_call_operand.vmem [shape: f32[3,8,4], index: 1, kind: input, shape index: {}]
  %s2 = inlined_call_operand.hbm [shape: f32[3,128,128], index: 2, kind: input, shape index: {}]
  %s3 = inlined_call_operand.vmem [shape: f32[8,128], index: 3, kind: input, shape index: {}]
  %s4 = inlined_call_operand.hbm [shape: f32[2,8,128], index: 4, kind: output, shape index: {}]
  %s5 = sld [smem:[#allocation0]]
  $region53: #{tpu_custom_call.1} parent=0
    _
  %s7 = ssub.s32 1, %s5
  %s8 = scalar_select 0, %s7, %s5
  $region1: #{tpu_custom_call.1} parent=0
    #allocation2 [shape = 'u8[196608]{0}', space=vmem, size = 0x30000, scoped, tag = 'input window, operand 2, single buffered']
    #allocation3 [shape = 's32[2]{0}', space=sflag, size = 0x8, scoped, tag = 'scoped memory for tpu_custom_call.1']
    #allocation4 [shape = 's32[2]{0}', space=sflag, size = 0x8, scoped, tag = 'scoped memory for tpu_custom_call.1']
    #allocation5 [shape = 'u8[8192]{0}', space=vmem, size = 0x2000, scoped, tag = 'output window, operand 0']
    %9 = vsyncpa [#allocation3], 0
    %10 = vsyncpa [#allocation4], 0
    %s11 = scalar_lea.sflag [#allocation4], 1
    %12 = vsyncpa %s11, 0
    loop: start=0, step=1, limit=4
    $region2: #{tpu_custom_call.1} parent=1 // loop_pre_header
      _
    $region3: #{tpu_custom_call.1} parent=1 // loop_header
      %s14 = sphi 0, %s18
      %p15 = scmp.ge.s32.totalorder %s14, 4
      %s21 = sphi 0, %s33
      %s22 = sphi 0, %s29
      %s23 = sphi 0, %s21
      %s24 = sphi 0, %s22
      %s25 = sphi 0, %s23
      %s26 = sphi 0, %s24
      %s38 = sphi 0, %s40
      %s41 = sphi 0, %s38
      %s42 = sphi 0, %s41
      %s58 = sphi 0, %s42
      %s62 = sphi 0, %s62
      %s64 = sphi 0, %s62
      %s65 = sphi 0, %s64
      %s79 = sphi 0, %s65
      %s83 = sphi 0, %s83
      %s85 = sphi 0, %s83
      %s86 = sphi 0, %s85
      %s100 = sphi 0, %s86
      %s104 = sphi 0, %s104
      %s106 = sphi 0, %s104
      %s107 = sphi 0, %s106
      %s121 = sphi 0, %s107
      %s129 = sphi 0, %s131
      %s132 = sphi 0, %s129
      %s133 = sphi 0, %s132
      %s149 = sphi 0, %s133
    $region4: #{tpu_custom_call.1} parent=1 // loop_header_branch
      %17 = sbr.rel (%p15) target = $region8
    $region5: #{tpu_custom_call.1} parent=1 // loop_body
      %s19 = ssub.s32 %s14, 1
      %s20 = ssub.s32 %s14, 2
      %s27 = sadd.s32 1, %s22
      %p28 = scmp.ge.s32.totalorder %s27, 1
      %s29 = scalar_select %p28, 0, %s27
      %s30 = sadd.s32 1, %s21
      %s31 = scalar_select %p28, %s30, %s21
      %p32 = scmp.ge.s32.totalorder %s31, 2
      %s33 = scalar_select %p32, 0, %s31
      %s34 = ssub.s32 %s21, %s33
      %s35 = ssub.s32 %s22, %s29
      %s36 = sor.u32 %s34, %s35
      %p37 = scmp.eq.s32.totalorder %s36, 0
      %s39 = sadd.s32 %s38, 1
      %s40 = scalar_select %p37, %s38, %s39
      %p43 = pneg %p37
      %p44 = scmp.eq.s32.totalorder %s14, 1
      %p45 = por %p43, %p44
      %p46 = scmp.ne.s32.totalorder %s38, %s41
      %p47 = scmp.eq.s32.totalorder %s14, 0
      %p48 = por %p46, %p47
      %p49 = scmp.ne.s32.totalorder %s38, %s41
      %p50 = scmp.eq.s32.totalorder %s19, 1
      %p51 = por %p49, %p50
      %p52 = scmp.ne.s32.totalorder %s41, %s42
      %p53 = scmp.eq.s32.totalorder %s19, 0
      %p54 = por %p52, %p53
      %p55 = scmp.ne.s32.totalorder %s41, %s42
      %p56 = scmp.eq.s32.totalorder %s20, 1
      %p57 = por %p55, %p56
      %p59 = scmp.ne.s32.totalorder %s42, %s58
      %p60 = scmp.eq.s32.totalorder %s20, 0
      %p61 = por %p59, %p60
      %s63 = sadd.s32 %s62, 1
      %p66 = scmp.eq.s32.totalorder %s14, 1
      %p67 = scmp.ne.s32.totalorder %s62, %s64
      %p68 = scmp.eq.s32.totalorder %s14, 0
      %p69 = por %p67, %p68
      %p70 = scmp.ne.s32.totalorder %s62, %s64
      %p71 = scmp.eq.s32.totalorder %s19, 1
      %p72 = por %p70, %p71
      %p73 = scmp.ne.s32.totalorder %s64, %s65
      %p74 = scmp.eq.s32.totalorder %s19, 0
      %p75 = por %p73, %p74
      %p76 = scmp.ne.s32.totalorder %s64, %s65
      %p77 = scmp.eq.s32.totalorder %s20, 1
      %p78 = por %p76, %p77
      %p80 = scmp.ne.s32.totalorder %s65, %s79
      %p81 = scmp.eq.s32.totalorder %s20, 0
      %p82 = por %p80, %p81
      %s84 = sadd.s32 %s83, 1
      %p87 = scmp.eq.s32.totalorder %s14, 1
      %p88 = scmp.ne.s32.totalorder %s83, %s85
      %p89 = scmp.eq.s32.totalorder %s14, 0
      %p90 = por %p88, %p89
      %p91 = scmp.ne.s32.totalorder %s83, %s85
      %p92 = scmp.eq.s32.totalorder %s19, 1
      %p93 = por %p91, %p92
      %p94 = scmp.ne.s32.totalorder %s85, %s86
      %p95 = scmp.eq.s32.totalorder %s19, 0
      %p96 = por %p94, %p95
      %p97 = scmp.ne.s32.totalorder %s85, %s86
      %p98 = scmp.eq.s32.totalorder %s20, 1
      %p99 = por %p97, %p98
      %p101 = scmp.ne.s32.totalorder %s86, %s100
      %p102 = scmp.eq.s32.totalorder %s20, 0
      %p103 = por %p101, %p102
      %s105 = sadd.s32 %s104, 1
      %p108 = scmp.eq.s32.totalorder %s14, 1
      %p109 = scmp.ne.s32.totalorder %s104, %s106
      %p110 = scmp.eq.s32.totalorder %s14, 0
      %p111 = por %p109, %p110
      %p112 = scmp.ne.s32.totalorder %s104, %s106
      %p113 = scmp.eq.s32.totalorder %s19, 1
      %p114 = por %p112, %p113
      %p115 = scmp.ne.s32.totalorder %s106, %s107
      %p116 = scmp.eq.s32.totalorder %s19, 0
      %p117 = por %p115, %p116
      %p118 = scmp.ne.s32.totalorder %s106, %s107
      %p119 = scmp.eq.s32.totalorder %s20, 1
      %p120 = por %p118, %p119
      %p122 = scmp.ne.s32.totalorder %s107, %s121
      %p123 = scmp.eq.s32.totalorder %s20, 0
      %p124 = por %p122, %p123
      %s125 = ssub.s32 %s21, %s33
      %s126 = ssub.s32 %s22, %s29
      %s127 = sor.u32 %s125, %s126
      %p128 = scmp.eq.s32.totalorder %s127, 0
      %s130 = sadd.s32 %s129, 1
      %s131 = scalar_select %p128, %s129, %s130
      %p134 = pneg %p128
      %p135 = scmp.eq.s32.totalorder %s14, 1
      %p136 = por %p134, %p135
      %p137 = scmp.ne.s32.totalorder %s129, %s132
      %p138 = scmp.eq.s32.totalorder %s14, 0
      %p139 = por %p137, %p138
      %p140 = scmp.ne.s32.totalorder %s129, %s132
      %p141 = scmp.eq.s32.totalorder %s19, 1
      %p142 = por %p140, %p141
      %p143 = scmp.ne.s32.totalorder %s132, %s133
      %p144 = scmp.eq.s32.totalorder %s19, 0
      %p145 = por %p143, %p144
      %p146 = scmp.ne.s32.totalorder %s132, %s133
      %p147 = scmp.eq.s32.totalorder %s20, 1
      %p148 = por %p146, %p147
      %p150 = scmp.ne.s32.totalorder %s133, %s149
      %p151 = scmp.eq.s32.totalorder %s20, 0
      %p152 = por %p150, %p151
      %p153 = scmp.le.s32.totalorder 1, %s14
      %p154 = scmp.lt.s32.totalorder %s14, 3
      %p155 = pnand %p153, %p154
      %p156 = pneg %p155
      // Predicated region
      $region9: #{tpu_custom_call.1} parent=5 // pred_check
        _
      $region10: #{tpu_custom_call.1} parent=5 // pred_check_branch
        %158 = sbr.rel (%p155) target = $region12
      $region11: #{tpu_custom_call.1} parent=5 // pred_region
        %s159 = ssub.s32 %s14, 1
        // Predicated region
        $region13: #{tpu_custom_call.1} parent=11 // pred_check
          %p160 = pneg %p75
        $region14: #{tpu_custom_call.1} parent=11 // pred_check_branch
          %162 = sbr.rel (%p160) target = $region16
        $region15: #{tpu_custom_call.1} parent=11 // pred_region
          _
        $region16: #{tpu_custom_call.1} parent=11 // pred_fallthru
          _
        // Predicated region
        $region17: #{tpu_custom_call.1} parent=11 // pred_check
          %p163 = pneg %p96
        $region18: #{tpu_custom_call.1} parent=11 // pred_check_branch
          %165 = sbr.rel (%p163) target = $region20
        $region19: #{tpu_custom_call.1} parent=11 // pred_region
          %s167 = ssub.s32 6144, 6144
          %168 = vsyncadd [#allocation3], %s167
          %s169 = sshll.u32 [#allocation2], 4
          %s170 = int_to_ptr.vmem [resolvable:$true] %s169
          %175 = dma.hbm_to_vmem [thread:$0]  %s2, 6144, %s170, [#allocation3], 128, 128, 8
        $region20: #{tpu_custom_call.1} parent=11 // pred_fallthru
          _
        // Predicated region
        $region21: #{tpu_custom_call.1} parent=11 // pred_check
          %p176 = pneg %p117
        $region22: #{tpu_custom_call.1} parent=11 // pred_check_branch
          %178 = sbr.rel (%p176) target = $region24
        $region23: #{tpu_custom_call.1} parent=11 // pred_region
          _
        $region24: #{tpu_custom_call.1} parent=11 // pred_fallthru
          _
      $region12: #{tpu_custom_call.1} parent=5 // pred_fallthru
        _
      %p179 = scmp.lt.s32.totalorder %s14, 2
      // Predicated region
      $region25: #{tpu_custom_call.1} parent=5 // pred_check
        %p180 = pneg %p179
      $region26: #{tpu_custom_call.1} parent=5 // pred_check_branch
        %182 = sbr.rel (%p180) target = $region28
      $region27: #{tpu_custom_call.1} parent=5 // pred_region
        // Predicated region
        $region29: #{tpu_custom_call.1} parent=27 // pred_check
          %p183 = pneg %p48
        $region30: #{tpu_custom_call.1} parent=27 // pred_check_branch
          %185 = sbr.rel (%p183) target = $region32
        $region31: #{tpu_custom_call.1} parent=27 // pred_region
          %p186 = scmp.lt.s32.totalorder %s21, 1
          %s187 = scalar_select %p186, %s21, 1
          %p188 = scmp.lt.s32.totalorder %s22, 0
          %s189 = scalar_select %p188, %s22, 0
          %s190 = sadd.s32 %s189, %s187
          %s191 = smul.addr %s190, 4
          %s192 = scalar_lea.vmem %s0, %s191
        $region32: #{tpu_custom_call.1} parent=27 // pred_fallthru
          _
      $region28: #{tpu_custom_call.1} parent=5 // pred_fallthru
        _
      %p193 = scmp.le.s32.totalorder 1, %s14
      %p194 = scmp.lt.s32.totalorder %s14, 3
      %p195 = pnand %p193, %p194
      %p196 = pneg %p195
      // Predicated region
      $region33: #{tpu_custom_call.1} parent=5 // pred_check
        _
      $region34: #{tpu_custom_call.1} parent=5 // pred_check_branch
        %198 = sbr.rel (%p195) target = $region36
      $region35: #{tpu_custom_call.1} parent=5 // pred_region
        %s199 = ssub.s32 %s14, 1
        // Predicated region
        $region37: #{tpu_custom_call.1} parent=35 // pred_check
          %p200 = pneg %p96
        $region38: #{tpu_custom_call.1} parent=35 // pred_check_branch
          %202 = sbr.rel (%p200) target = $region40
        $region39: #{tpu_custom_call.1} parent=35 // pred_region
          %203 = dma.done [#allocation3], 6144
        $region40: #{tpu_custom_call.1} parent=35 // pred_fallthru
          _
        %p204 = scmp.lt.s32.totalorder %s23, 1
        %s205 = scalar_select %p204, %s23, 1
        %p206 = scmp.lt.s32.totalorder %s24, 0
        %s207 = scalar_select %p206, %s24, 0
        %s208 = sadd.s32 %s207, %s205
        %s209 = smul.addr %s208, 4
        %s210 = scalar_lea.vmem %s0, %s209
        %p211 = pneg %p54
        %p212 = pneg %p51
        %p213 = pneg %p75
        %p214 = pneg %p72
        %p215 = pneg %p96
        %p216 = pneg %p93
        %p217 = pneg %p117
        %p218 = pneg %p114
        %p219 = pneg %p145
        %p220 = pneg %p142
        %s221 = sand.u32 %s132, 1
        %s222 = scalar_lea.sflag [#allocation4], %s221
        %s223 = sand.u32 %s132, 1
        %s224 = smul.addr %s223, 8
        %s225 = scalar_lea.vmem [#allocation5], %s224
        %p226 = scmp.lt.s32.totalorder %s23, 1
        %s227 = scalar_select %p226, %s23, 1
        %p228 = scmp.lt.s32.totalorder %s24, 0
        %s229 = scalar_select %p228, %s24, 0
        %s230 = sadd.s32 %s229, %s227
        %s231 = smul.addr %s230, 4
        %s232 = scalar_lea.vmem %s0, %s231
        %v233 = vld [vmem:[%s3] sm:$0xff]
        %v234 = vld [vmem:[%s232] sm:$0xf]
        %v235 = vld [vmem:[#allocation2] sm:$0xff]
        %v236 = vld [vmem:[#allocation2 + $0x8] sm:$0xff]
        %v237 = vld [vmem:[#allocation2 + $0x10] sm:$0xff]
        %v238 = vld [vmem:[#allocation2 + $0x18] sm:$0xff]
        %v239 = vld [vmem:[#allocation2 + $0x20] sm:$0xff]
        %v240 = vld [vmem:[#allocation2 + $0x28] sm:$0xff]
        %v241 = vld [vmem:[#allocation2 + $0x30] sm:$0xff]
        %v242 = vld [vmem:[#allocation2 + $0x38] sm:$0xff]
        %v243 = vld [vmem:[#allocation2 + $0x40] sm:$0xff]
        %v244 = vld [vmem:[#allocation2 + $0x48] sm:$0xff]
        %v245 = vld [vmem:[#allocation2 + $0x50] sm:$0xff]
        %v246 = vld [vmem:[#allocation2 + $0x58] sm:$0xff]
        %v247 = vld [vmem:[#allocation2 + $0x60] sm:$0xff]
        %v248 = vld [vmem:[#allocation2 + $0x68] sm:$0xff]
        %v249 = vld [vmem:[#allocation2 + $0x70] sm:$0xff]
        %v250 = vld [vmem:[#allocation2 + $0x78] sm:$0xff]
        %251 = vmatprep.subr.mxu0 0.0
        %252 = vmatpush1.msra.mxu0 %v235
        %253 = vmatprep.subr.mxu0 0.0
        %254 = vmatpush1.msra.mxu0 %v236
        %255 = vmatprep.subr.mxu0 0.0
        %256 = vmatpush1.msra.mxu0 %v237
        %257 = vmatprep.subr.mxu0 0.0
        %258 = vmatpush1.msra.mxu0 %v238
        %259 = vmatprep.subr.mxu0 0.0
        %260 = vmatpush1.msra.mxu0 %v239
        %261 = vmatprep.subr.mxu0 0.0
        %262 = vmatpush1.msra.mxu0 %v240
        %263 = vmatprep.subr.mxu0 0.0
        %264 = vmatpush1.msra.mxu0 %v241
        %265 = vmatprep.subr.mxu0 0.0
        %266 = vmatpush1.msra.mxu0 %v242
        %267 = vmatprep.subr.mxu0 0.0
        %268 = vmatpush1.msra.mxu0 %v243
        %269 = vmatprep.subr.mxu0 0.0
        %270 = vmatpush1.msra.mxu0 %v244
        %271 = vmatprep.subr.mxu0 0.0
        %272 = vmatpush1.msra.mxu0 %v245
        %273 = vmatprep.subr.mxu0 0.0
        %274 = vmatpush1.msra.mxu0 %v246
        %275 = vmatprep.subr.mxu0 0.0
        %276 = vmatpush1.msra.mxu0 %v247
        %277 = vmatprep.subr.mxu0 0.0
        %278 = vmatpush1.msra.mxu0 %v248
        %279 = vmatprep.subr.mxu0 0.0
        %280 = vmatpush1.msra.mxu0 %v249
        %281 = vmatprep.subr.mxu0 0.0
        %282 = vmatpush1.msra.mxu0 %v250
        %283 = vmatprep.subr.mxu0 0.0
        %284 = vmatpush1.msra.mxu0 0.0
        %285 = vmatprep.subr.mxu0 0.0
        %286 = vmatpush1.msra.mxu0 0.0
        %287 = vmatprep.subr.mxu0 0.0
        %288 = vmatpush1.msra.mxu0 0.0
        %289 = vmatprep.subr.mxu0 0.0
        %290 = vmatpush1.msra.mxu0 0.0
        %291 = vmatprep.subr.mxu0 0.0
        %292 = vmatpush1.msra.mxu0 0.0
        %293 = vmatprep.subr.mxu0 0.0
        %294 = vmatpush1.msra.mxu0 0.0
        %295 = vmatprep.subr.mxu0 0.0
        %296 = vmatpush1.msra.mxu0 0.0
        %297 = vmatprep.subr.mxu0 0.0
        %298 = vmatpush1.msra.mxu0 0.0
        %299 = vmatprep.subr.mxu0 0.0
        %300 = vmatpush1.msra.mxu0 0.0
        %301 = vmatprep.subr.mxu0 0.0
        %302 = vmatpush1.msra.mxu0 0.0
        %303 = vmatprep.subr.mxu0 0.0
        %304 = vmatpush1.msra.mxu0 0.0
        %305 = vmatprep.subr.mxu0 0.0
        %306 = vmatpush1.msra.mxu0 0.0
        %307 = vmatprep.subr.mxu0 0.0
        %308 = vmatpush1.msra.mxu0 0.0
        %309 = vmatprep.subr.mxu0 0.0
        %310 = vmatpush1.msra.mxu0 0.0
        %311 = vmatprep.subr.mxu0 0.0
        %312 = vmatpush1.msra.mxu0 0.0
        %313 = vmatprep.subr.mxu0 0.0
        %314 = vmatpush1.msra.mxu0 0.0
        %315 = vmatprep.mubr.f32.mxu0 0.0
        %316 = vmatmul.mubr.f32.gmra.mrb[0].mxu0 %v234
        %v317 = vpop.f32.mrb[0].mxu0
        %v318 = vadd.f32 0.0, %v317
        %v319 = vpop.f32.mrb[0].mxu0
        %320 = vdwg.mxu0
        %v321 = vld [vmem:[%s1] sm:$0xff]
        %vm322 = vcmask 31744
        %v324 = vsel %vm322, %v321, 0
        %vm326 = vcmask 1043456
        %v328 = vsel %vm326, %v318, 0
        %330 = vmatprep.subr.mxu0 0.0
        %331 = vmatpush1.msra.mxu0 %v328
        %332 = vmatprep.subr.mxu0 0.0
        %333 = vmatpush1.msra.mxu0 0.0
        %334 = vmatprep.subr.mxu0 0.0
        %335 = vmatpush1.msra.mxu0 0.0
        %336 = vmatprep.subr.mxu0 0.0
        %337 = vmatpush1.msra.mxu0 0.0
        %338 = vmatprep.subr.mxu0 0.0
        %339 = vmatpush1.msra.mxu0 0.0
        %340 = vmatprep.subr.mxu0 0.0
        %341 = vmatpush1.msra.mxu0 0.0
        %342 = vmatprep.subr.mxu0 0.0
        %343 = vmatpush1.msra.mxu0 0.0
        %344 = vmatprep.subr.mxu0 0.0
        %345 = vmatpush1.msra.mxu0 0.0
        %346 = vmatprep.subr.mxu0 0.0
        %347 = vmatpush1.msra.mxu0 0.0
        %348 = vmatprep.subr.mxu0 0.0
        %349 = vmatpush1.msra.mxu0 0.0
        %350 = vmatprep.subr.mxu0 0.0
        %351 = vmatpush1.msra.mxu0 0.0
        %352 = vmatprep.subr.mxu0 0.0
        %353 = vmatpush1.msra.mxu0 0.0
        %354 = vmatprep.subr.mxu0 0.0
        %355 = vmatpush1.msra.mxu0 0.0
        %356 = vmatprep.subr.mxu0 0.0
        %357 = vmatpush1.msra.mxu0 0.0
        %358 = vmatprep.subr.mxu0 0.0
        %359 = vmatpush1.msra.mxu0 0.0
        %360 = vmatprep.subr.mxu0 0.0
        %361 = vmatpush1.msra.mxu0 0.0
        %362 = vmatprep.subr.mxu0 0.0
        %363 = vmatpush1.msra.mxu0 0.0
        %364 = vmatprep.subr.mxu0 0.0
        %365 = vmatpush1.msra.mxu0 0.0
        %366 = vmatprep.subr.mxu0 0.0
        %367 = vmatpush1.msra.mxu0 0.0
        %368 = vmatprep.subr.mxu0 0.0
        %369 = vmatpush1.msra.mxu0 0.0
        %370 = vmatprep.subr.mxu0 0.0
        %371 = vmatpush1.msra.mxu0 0.0
        %372 = vmatprep.subr.mxu0 0.0
        %373 = vmatpush1.msra.mxu0 0.0
        %374 = vmatprep.subr.mxu0 0.0
        %375 = vmatpush1.msra.mxu0 0.0
        %376 = vmatprep.subr.mxu0 0.0
        %377 = vmatpush1.msra.mxu0 0.0
        %378 = vmatprep.subr.mxu0 0.0
        %379 = vmatpush1.msra.mxu0 0.0
        %380 = vmatprep.subr.mxu0 0.0
        %381 = vmatpush1.msra.mxu0 0.0
        %382 = vmatprep.subr.mxu0 0.0
        %383 = vmatpush1.msra.mxu0 0.0
        %384 = vmatprep.subr.mxu0 0.0
        %385 = vmatpush1.msra.mxu0 0.0
        %386 = vmatprep.subr.mxu0 0.0
        %387 = vmatpush1.msra.mxu0 0.0
        %388 = vmatprep.subr.mxu0 0.0
        %389 = vmatpush1.msra.mxu0 0.0
        %390 = vmatprep.subr.mxu0 0.0
        %391 = vmatpush1.msra.mxu0 0.0
        %392 = vmatprep.subr.mxu0 0.0
        %393 = vmatpush1.msra.mxu0 0.0
        %394 = vmatprep.mubr.f32.mxu0 0.0
        %395 = vmatmul.mubr.f32.gmra.mrb[0].mxu0 %v324
        %v396 = vpop.f32.mrb[0].mxu0
        %v397 = vadd.f32 0.0, %v396
        %v398 = vpop.f32.mrb[0].mxu0
        %399 = vdwg.mxu0
        %v400 = vadd.f32 %v233, %v397
        %s401 = scalar_lea.vmem [#allocation2], 128
        %v402 = vld [vmem:[%s401] sm:$0xff]
        %v403 = vld [vmem:[%s401 + $0x8] sm:$0xff]
        %v404 = vld [vmem:[%s401 + $0x10] sm:$0xff]
        %v405 = vld [vmem:[%s401 + $0x18] sm:$0xff]
        %v406 = vld [vmem:[%s401 + $0x20] sm:$0xff]
        %v407 = vld [vmem:[%s401 + $0x28] sm:$0xff]
        %v408 = vld [vmem:[%s401 + $0x30] sm:$0xff]
        %v409 = vld [vmem:[%s401 + $0x38] sm:$0xff]
        %v410 = vld [vmem:[%s401 + $0x40] sm:$0xff]
        %v411 = vld [vmem:[%s401 + $0x48] sm:$0xff]
        %v412 = vld [vmem:[%s401 + $0x50] sm:$0xff]
        %v413 = vld [vmem:[%s401 + $0x58] sm:$0xff]
        %v414 = vld [vmem:[%s401 + $0x60] sm:$0xff]
        %v415 = vld [vmem:[%s401 + $0x68] sm:$0xff]
        %v416 = vld [vmem:[%s401 + $0x70] sm:$0xff]
        %v417 = vld [vmem:[%s401 + $0x78] sm:$0xff]
        %418 = vmatprep.subr.mxu0 0.0
        %419 = vmatpush1.msra.mxu0 %v402
        %420 = vmatprep.subr.mxu0 0.0
        %421 = vmatpush1.msra.mxu0 %v403
        %422 = vmatprep.subr.mxu0 0.0
        %423 = vmatpush1.msra.mxu0 %v404
        %424 = vmatprep.subr.mxu0 0.0
        %425 = vmatpush1.msra.mxu0 %v405
        %426 = vmatprep.subr.mxu0 0.0
        %427 = vmatpush1.msra.mxu0 %v406
        %428 = vmatprep.subr.mxu0 0.0
        %429 = vmatpush1.msra.mxu0 %v407
        %430 = vmatprep.subr.mxu0 0.0
        %431 = vmatpush1.msra.mxu0 %v408
        %432 = vmatprep.subr.mxu0 0.0
        %433 = vmatpush1.msra.mxu0 %v409
        %434 = vmatprep.subr.mxu0 0.0
        %435 = vmatpush1.msra.mxu0 %v410
        %436 = vmatprep.subr.mxu0 0.0
        %437 = vmatpush1.msra.mxu0 %v411
        %438 = vmatprep.subr.mxu0 0.0
        %439 = vmatpush1.msra.mxu0 %v412
        %440 = vmatprep.subr.mxu0 0.0
        %441 = vmatpush1.msra.mxu0 %v413
        %442 = vmatprep.subr.mxu0 0.0
        %443 = vmatpush1.msra.mxu0 %v414
        %444 = vmatprep.subr.mxu0 0.0
        %445 = vmatpush1.msra.mxu0 %v415
        %446 = vmatprep.subr.mxu0 0.0
        %447 = vmatpush1.msra.mxu0 %v416
        %448 = vmatprep.subr.mxu0 0.0
        %449 = vmatpush1.msra.mxu0 %v417
        %450 = vmatprep.subr.mxu0 0.0
        %451 = vmatpush1.msra.mxu0 0.0
        %452 = vmatprep.subr.mxu0 0.0
        %453 = vmatpush1.msra.mxu0 0.0
        %454 = vmatprep.subr.mxu0 0.0
        %455 = vmatpush1.msra.mxu0 0.0
        %456 = vmatprep.subr.mxu0 0.0
        %457 = vmatpush1.msra.mxu0 0.0
        %458 = vmatprep.subr.mxu0 0.0
        %459 = vmatpush1.msra.mxu0 0.0
        %460 = vmatprep.subr.mxu0 0.0
        %461 = vmatpush1.msra.mxu0 0.0
        %462 = vmatprep.subr.mxu0 0.0
        %463 = vmatpush1.msra.mxu0 0.0
        %464 = vmatprep.subr.mxu0 0.0
        %465 = vmatpush1.msra.mxu0 0.0
        %466 = vmatprep.subr.mxu0 0.0
        %467 = vmatpush1.msra.mxu0 0.0
        %468 = vmatprep.subr.mxu0 0.0
        %469 = vmatpush1.msra.mxu0 0.0
        %470 = vmatprep.subr.mxu0 0.0
        %471 = vmatpush1.msra.mxu0 0.0
        %472 = vmatprep.subr.mxu0 0.0
        %473 = vmatpush1.msra.mxu0 0.0
        %474 = vmatprep.subr.mxu0 0.0
        %475 = vmatpush1.msra.mxu0 0.0
        %476 = vmatprep.subr.mxu0 0.0
        %477 = vmatpush1.msra.mxu0 0.0
        %478 = vmatprep.subr.mxu0 0.0
        %479 = vmatpush1.msra.mxu0 0.0
        %480 = vmatprep.subr.mxu0 0.0
        %481 = vmatpush1.msra.mxu0 0.0
        %482 = vmatprep.mubr.f32.mxu0 0.0
        %483 = vmatmul.mubr.f32.gmra.mrb[0].mxu0 %v234
        %v484 = vpop.f32.mrb[0].mxu0
        %v485 = vadd.f32 0.0, %v484
        %v486 = vpop.f32.mrb[0].mxu0
        %487 = vdwg.mxu0
        %s488 = scalar_lea.vmem %s1, 8
        %v489 = vld [vmem:[%s488] sm:$0xff]
        %v491 = vsel %vm322, %v489, 0
        %v494 = vsel %vm326, %v485, 0
        %496 = vmatprep.subr.mxu0 0.0
        %497 = vmatpush1.msra.mxu0 %v494
        %498 = vmatprep.subr.mxu0 0.0
        %499 = vmatpush1.msra.mxu0 0.0
        %500 = vmatprep.subr.mxu0 0.0
        %501 = vmatpush1.msra.mxu0 0.0
        %502 = vmatprep.subr.mxu0 0.0
        %503 = vmatpush1.msra.mxu0 0.0
        %504 = vmatprep.subr.mxu0 0.0
        %505 = vmatpush1.msra.mxu0 0.0
        %506 = vmatprep.subr.mxu0 0.0
        %507 = vmatpush1.msra.mxu0 0.0
        %508 = vmatprep.subr.mxu0 0.0
        %509 = vmatpush1.msra.mxu0 0.0
        %510 = vmatprep.subr.mxu0 0.0
        %511 = vmatpush1.msra.mxu0 0.0
        %512 = vmatprep.subr.mxu0 0.0
        %513 = vmatpush1.msra.mxu0 0.0
        %514 = vmatprep.subr.mxu0 0.0
        %515 = vmatpush1.msra.mxu0 0.0
        %516 = vmatprep.subr.mxu0 0.0
        %517 = vmatpush1.msra.mxu0 0.0
        %518 = vmatprep.subr.mxu0 0.0
        %519 = vmatpush1.msra.mxu0 0.0
        %520 = vmatprep.subr.mxu0 0.0
        %521 = vmatpush1.msra.mxu0 0.0
        %522 = vmatprep.subr.mxu0 0.0
        %523 = vmatpush1.msra.mxu0 0.0
        %524 = vmatprep.subr.mxu0 0.0
        %525 = vmatpush1.msra.mxu0 0.0
        %526 = vmatprep.subr.mxu0 0.0
        %527 = vmatpush1.msra.mxu0 0.0
        %528 = vmatprep.subr.mxu0 0.0
        %529 = vmatpush1.msra.mxu0 0.0
        %530 = vmatprep.subr.mxu0 0.0
        %531 = vmatpush1.msra.mxu0 0.0
        %532 = vmatprep.subr.mxu0 0.0
        %533 = vmatpush1.msra.mxu0 0.0
        %534 = vmatprep.subr.mxu0 0.0
        %535 = vmatpush1.msra.mxu0 0.0
        %536 = vmatprep.subr.mxu0 0.0
        %537 = vmatpush1.msra.mxu0 0.0
        %538 = vmatprep.subr.mxu0 0.0
        %539 = vmatpush1.msra.mxu0 0.0
        %540 = vmatprep.subr.mxu0 0.0
        %541 = vmatpush1.msra.mxu0 0.0
        %542 = vmatprep.subr.mxu0 0.0
        %543 = vmatpush1.msra.mxu0 0.0
        %544 = vmatprep.subr.mxu0 0.0
        %545 = vmatpush1.msra.mxu0 0.0
        %546 = vmatprep.subr.mxu0 0.0
        %547 = vmatpush1.msra.mxu0 0.0
        %548 = vmatprep.subr.mxu0 0.0
        %549 = vmatpush1.msra.mxu0 0.0
        %550 = vmatprep.subr.mxu0 0.0
        %551 = vmatpush1.msra.mxu0 0.0
        %552 = vmatprep.subr.mxu0 0.0
        %553 = vmatpush1.msra.mxu0 0.0
        %554 = vmatprep.subr.mxu0 0.0
        %555 = vmatpush1.msra.mxu0 0.0
        %556 = vmatprep.subr.mxu0 0.0
        %557 = vmatpush1.msra.mxu0 0.0
        %558 = vmatprep.subr.mxu0 0.0
        %559 = vmatpush1.msra.mxu0 0.0
        %560 = vmatprep.mubr.f32.mxu0 0.0
        %561 = vmatmul.mubr.f32.gmra.mrb[0].mxu0 %v491
        %v562 = vpop.f32.mrb[0].mxu0
        %v563 = vadd.f32 0.0, %v562
        %v564 = vpop.f32.mrb[0].mxu0
        %565 = vdwg.mxu0
        %v566 = vadd.f32 %v400, %v563
        %s567 = scalar_lea.vmem [#allocation2], 256
        %v568 = vld [vmem:[%s567] sm:$0xff]
        %v569 = vld [vmem:[%s567 + $0x8] sm:$0xff]
        %v570 = vld [vmem:[%s567 + $0x10] sm:$0xff]
        %v571 = vld [vmem:[%s567 + $0x18] sm:$0xff]
        %v572 = vld [vmem:[%s567 + $0x20] sm:$0xff]
        %v573 = vld [vmem:[%s567 + $0x28] sm:$0xff]
        %v574 = vld [vmem:[%s567 + $0x30] sm:$0xff]
        %v575 = vld [vmem:[%s567 + $0x38] sm:$0xff]
        %v576 = vld [vmem:[%s567 + $0x40] sm:$0xff]
        %v577 = vld [vmem:[%s567 + $0x48] sm:$0xff]
        %v578 = vld [vmem:[%s567 + $0x50] sm:$0xff]
        %v579 = vld [vmem:[%s567 + $0x58] sm:$0xff]
        %v580 = vld [vmem:[%s567 + $0x60] sm:$0xff]
        %v581 = vld [vmem:[%s567 + $0x68] sm:$0xff]
        %v582 = vld [vmem:[%s567 + $0x70] sm:$0xff]
        %v583 = vld [vmem:[%s567 + $0x78] sm:$0xff]
        %584 = vmatprep.subr.mxu0 0.0
        %585 = vmatpush1.msra.mxu0 %v568
        %586 = vmatprep.subr.mxu0 0.0
        %587 = vmatpush1.msra.mxu0 %v569
        %588 = vmatprep.subr.mxu0 0.0
        %589 = vmatpush1.msra.mxu0 %v570
        %590 = vmatprep.subr.mxu0 0.0
        %591 = vmatpush1.msra.mxu0 %v571
        %592 = vmatprep.subr.mxu0 0.0
        %593 = vmatpush1.msra.mxu0 %v572
        %594 = vmatprep.subr.mxu0 0.0
        %595 = vmatpush1.msra.mxu0 %v573
        %596 = vmatprep.subr.mxu0 0.0
        %597 = vmatpush1.msra.mxu0 %v574
        %598 = vmatprep.subr.mxu0 0.0
        %599 = vmatpush1.msra.mxu0 %v575
        %600 = vmatprep.subr.mxu0 0.0
        %601 = vmatpush1.msra.mxu0 %v576
        %602 = vmatprep.subr.mxu0 0.0
        %603 = vmatpush1.msra.mxu0 %v577
        %604 = vmatprep.subr.mxu0 0.0
        %605 = vmatpush1.msra.mxu0 %v578
        %606 = vmatprep.subr.mxu0 0.0
        %607 = vmatpush1.msra.mxu0 %v579
        %608 = vmatprep.subr.mxu0 0.0
        %609 = vmatpush1.msra.mxu0 %v580
        %610 = vmatprep.subr.mxu0 0.0
        %611 = vmatpush1.msra.mxu0 %v581
        %612 = vmatprep.subr.mxu0 0.0
        %613 = vmatpush1.msra.mxu0 %v582
        %614 = vmatprep.subr.mxu0 0.0
        %615 = vmatpush1.msra.mxu0 %v583
        %616 = vmatprep.subr.mxu0 0.0
        %617 = vmatpush1.msra.mxu0 0.0
        %618 = vmatprep.subr.mxu0 0.0
        %619 = vmatpush1.msra.mxu0 0.0
        %620 = vmatprep.subr.mxu0 0.0
        %621 = vmatpush1.msra.mxu0 0.0
        %622 = vmatprep.subr.mxu0 0.0
        %623 = vmatpush1.msra.mxu0 0.0
        %624 = vmatprep.subr.mxu0 0.0
        %625 = vmatpush1.msra.mxu0 0.0
        %626 = vmatprep.subr.mxu0 0.0
        %627 = vmatpush1.msra.mxu0 0.0
        %628 = vmatprep.subr.mxu0 0.0
        %629 = vmatpush1.msra.mxu0 0.0
        %630 = vmatprep.subr.mxu0 0.0
        %631 = vmatpush1.msra.mxu0 0.0
        %632 = vmatprep.subr.mxu0 0.0
        %633 = vmatpush1.msra.mxu0 0.0
        %634 = vmatprep.subr.mxu0 0.0
        %635 = vmatpush1.msra.mxu0 0.0
        %636 = vmatprep.subr.mxu0 0.0
        %637 = vmatpush1.msra.mxu0 0.0
        %638 = vmatprep.subr.mxu0 0.0
        %639 = vmatpush1.msra.mxu0 0.0
        %640 = vmatprep.subr.mxu0 0.0
        %641 = vmatpush1.msra.mxu0 0.0
        %642 = vmatprep.subr.mxu0 0.0
        %643 = vmatpush1.msra.mxu0 0.0
        %644 = vmatprep.subr.mxu0 0.0
        %645 = vmatpush1.msra.mxu0 0.0
        %646 = vmatprep.subr.mxu0 0.0
        %647 = vmatpush1.msra.mxu0 0.0
        %648 = vmatprep.mubr.f32.mxu0 0.0
        %649 = vmatmul.mubr.f32.gmra.mrb[0].mxu0 %v234
        %v650 = vpop.f32.mrb[0].mxu0
        %v651 = vadd.f32 0.0, %v650
        %v652 = vpop.f32.mrb[0].mxu0
        %653 = vdwg.mxu0
        %s654 = scalar_lea.vmem %s1, 16
        %v655 = vld [vmem:[%s654] sm:$0xff]
        %v657 = vsel %vm322, %v655, 0
        %v660 = vsel %vm326, %v651, 0
        %662 = vmatprep.subr.mxu0 0.0
        %663 = vmatpush1.msra.mxu0 %v660
        %664 = vmatprep.subr.mxu0 0.0
        %665 = vmatpush1.msra.mxu0 0.0
        %666 = vmatprep.subr.mxu0 0.0
        %667 = vmatpush1.msra.mxu0 0.0
        %668 = vmatprep.subr.mxu0 0.0
        %669 = vmatpush1.msra.mxu0 0.0
        %670 = vmatprep.subr.mxu0 0.0
        %671 = vmatpush1.msra.mxu0 0.0
        %672 = vmatprep.subr.mxu0 0.0
        %673 = vmatpush1.msra.mxu0 0.0
        %674 = vmatprep.subr.mxu0 0.0
        %675 = vmatpush1.msra.mxu0 0.0
        %676 = vmatprep.subr.mxu0 0.0
        %677 = vmatpush1.msra.mxu0 0.0
        %678 = vmatprep.subr.mxu0 0.0
        %679 = vmatpush1.msra.mxu0 0.0
        %680 = vmatprep.subr.mxu0 0.0
        %681 = vmatpush1.msra.mxu0 0.0
        %682 = vmatprep.subr.mxu0 0.0
        %683 = vmatpush1.msra.mxu0 0.0
        %684 = vmatprep.subr.mxu0 0.0
        %685 = vmatpush1.msra.mxu0 0.0
        %686 = vmatprep.subr.mxu0 0.0
        %687 = vmatpush1.msra.mxu0 0.0
        %688 = vmatprep.subr.mxu0 0.0
        %689 = vmatpush1.msra.mxu0 0.0
        %690 = vmatprep.subr.mxu0 0.0
        %691 = vmatpush1.msra.mxu0 0.0
        %692 = vmatprep.subr.mxu0 0.0
        %693 = vmatpush1.msra.mxu0 0.0
        %694 = vmatprep.subr.mxu0 0.0
        %695 = vmatpush1.msra.mxu0 0.0
        %696 = vmatprep.subr.mxu0 0.0
        %697 = vmatpush1.msra.mxu0 0.0
        %698 = vmatprep.subr.mxu0 0.0
        %699 = vmatpush1.msra.mxu0 0.0
        %700 = vmatprep.subr.mxu0 0.0
        %701 = vmatpush1.msra.mxu0 0.0
        %702 = vmatprep.subr.mxu0 0.0
        %703 = vmatpush1.msra.mxu0 0.0
        %704 = vmatprep.subr.mxu0 0.0
        %705 = vmatpush1.msra.mxu0 0.0
        %706 = vmatprep.subr.mxu0 0.0
        %707 = vmatpush1.msra.mxu0 0.0
        %708 = vmatprep.subr.mxu0 0.0
        %709 = vmatpush1.msra.mxu0 0.0
        %710 = vmatprep.subr.mxu0 0.0
        %711 = vmatpush1.msra.mxu0 0.0
        %712 = vmatprep.subr.mxu0 0.0
        %713 = vmatpush1.msra.mxu0 0.0
        %714 = vmatprep.subr.mxu0 0.0
        %715 = vmatpush1.msra.mxu0 0.0
        %716 = vmatprep.subr.mxu0 0.0
        %717 = vmatpush1.msra.mxu0 0.0
        %718 = vmatprep.subr.mxu0 0.0
        %719 = vmatpush1.msra.mxu0 0.0
        %720 = vmatprep.subr.mxu0 0.0
        %721 = vmatpush1.msra.mxu0 0.0
        %722 = vmatprep.subr.mxu0 0.0
        %723 = vmatpush1.msra.mxu0 0.0
        %724 = vmatprep.subr.mxu0 0.0
        %725 = vmatpush1.msra.mxu0 0.0
        %726 = vmatprep.mubr.f32.mxu0 0.0
        %727 = vmatmul.mubr.f32.gmra.mrb[0].mxu0 %v657
        %v728 = vpop.f32.mrb[0].mxu0
        %v729 = vadd.f32 0.0, %v728
        %v730 = vpop.f32.mrb[0].mxu0
        %731 = vdwg.mxu0
        %v732 = vadd.f32 %v566, %v729
        %733 = vst [vmem:[%s225] sm:$0xff] %v732
        %s734 = sand.u32 %s132, 1
        %s735 = scalar_lea.sflag [#allocation4], %s734
        %s736 = sand.u32 %s132, 1
        %s737 = smul.addr %s736, 8
        %s738 = scalar_lea.vmem [#allocation5], %s737
        // Predicated region
        $region41: #{tpu_custom_call.1} parent=35 // pred_check
          %p739 = pneg %p142
        $region42: #{tpu_custom_call.1} parent=35 // pred_check_branch
          %741 = sbr.rel (%p739) target = $region44
        $region43: #{tpu_custom_call.1} parent=35 // pred_region
          %s743 = ssub.s32 128, 128
          %744 = vsyncadd %s735, %s743
          %s745 = sadd.s32 %s24, %s23
          %s746 = smul.addr %s745, 128
          %s747 = scalar_lea.hbm %s4, %s746
          %s749 = sshll.u32 %s738, 4
          %s750 = int_to_ptr.vmem [resolvable:$true] %s749
          %752 = dma.vmem_to_hbm [thread:$0]  %s750, 128, %s747, %s735
        $region44: #{tpu_custom_call.1} parent=35 // pred_fallthru
          _
      $region36: #{tpu_custom_call.1} parent=5 // pred_fallthru
        _
      %p753 = scmp.le.s32.totalorder 2, %s14
      // Predicated region
      $region45: #{tpu_custom_call.1} parent=5 // pred_check
        %p754 = pneg %p753
      $region46: #{tpu_custom_call.1} parent=5 // pred_check_branch
        %756 = sbr.rel (%p754) target = $region48
      $region47: #{tpu_custom_call.1} parent=5 // pred_region
        %s757 = ssub.s32 %s14, 2
        // Predicated region
        $region49: #{tpu_custom_call.1} parent=47 // pred_check
          %p758 = pneg %p148
        $region50: #{tpu_custom_call.1} parent=47 // pred_check_branch
          %760 = sbr.rel (%p758) target = $region52
        $region51: #{tpu_custom_call.1} parent=47 // pred_region
          %s761 = sand.u32 %s133, 1
          %s762 = scalar_lea.sflag [#allocation4], %s761
          %s763 = sand.u32 %s133, 1
          %s764 = smul.addr %s763, 8
          %s765 = scalar_lea.vmem [#allocation5], %s764
          %766 = dma.done %s762, 128
        $region52: #{tpu_custom_call.1} parent=47 // pred_fallthru
          _
      $region48: #{tpu_custom_call.1} parent=5 // pred_fallthru
        _
    $region6: #{tpu_custom_call.1} parent=1 // loop_footer
      %s18 = sadd.s32 1, %s14
    $region7: #{tpu_custom_call.1} parent=1 // loop_footer_branch
      %13 = sbr.rel target = $region3
    $region8: #{tpu_custom_call.1} parent=1 // loop_exit
      _
    %767 = vsyncpa [#allocation3], 1
    %s768 = scalar_lea.sflag [#allocation3], 1
    %769 = vsyncpa %s768, 1
    %770 = vsyncpa [#allocation4], 1
    %s771 = scalar_lea.sflag [#allocation4], 1
    %772 = vsyncpa %s771, 1

</llo_original>
